<compile_context>
chip_gen: v7x
topology: tpu7x:2x2x1
jax: 0.10.0
libtpu: 0.0.40
codegen_flags: <defaults>
</compile_context>

<pallas_src>
import math

import jax
import jax.numpy as jnp
from jax.experimental import pallas as pl
from jax.experimental.pallas import tpu as pltpu

_LANES = 128
_SUBLANES = 8
_TILE_ROW_CAP = 4096            # max batch rows per grid step
_FUSED_MAX_NODES = 1024         # fused path: bound on the all-node MXU matmul
_FUSED_MAX_TABLE_BYTES = 2 << 20  # fused path: table must be "small" (VMEM-resident)


def _round_up(x, m):
    return ((x + m - 1) // m) * m


def _log_sigmoid(x):
    # Stable log(sigmoid(x)) = min(x, 0) - log1p(exp(-|x|)).
    return jnp.minimum(x, 0.0) - jnp.log1p(jnp.exp(-jnp.abs(x)))


def _row_mask(tile_n, n_ref):
    # Valid-row mask for the ragged last tile (no jnp.pad on the host side).
    row = pl.program_id(0) * tile_n + jax.lax.broadcasted_iota(
        jnp.int32, (tile_n, 1), 0)
    return row < n_ref[0]


def _write_partial(out_ref, total, valid):
    # total, valid: (tile_n, 1).  Padding rows in the ragged edge block carry
    # garbage (possibly NaN/Inf) -> exclude them with a select, never a mul.
    partial = jnp.sum(jnp.where(valid, total, 0.0), axis=0, keepdims=True)  # (1,1)
    out_ref[...] = jnp.broadcast_to(partial[:, :, None], out_ref.shape)


def _nsloss_fused_kernel(n_ref, idx_ref, embs_ref, wtab_ref, out_ref):
    """Fused gather: weights table VMEM-resident, scores via MXU + one-hot select."""
    tile_n = embs_ref.shape[0]
    num_nodes = wtab_ref.shape[0]
    s1 = idx_ref.shape[1]                                  # S + 1

    # MXU: scores against every node -> (T, N), f32 accumulation.
    # (bf16 operands feed the MXU directly; exact for the bf16-quantized inputs.)
    scores_all = jax.lax.dot_general(
        embs_ref[...], wtab_ref[...],
        dimension_numbers=(((1,), (1,)), ((), ())),
        preferred_element_type=jnp.float32)                # (T, N)

    node_ids = jax.lax.broadcasted_iota(jnp.int32, (tile_n, num_nodes), 1)

    total = jnp.zeros((tile_n, 1), jnp.float32)
    for s in range(s1):                                    # static, S+1 is small
        sel = idx_ref[:, s:s + 1] == node_ids              # (T, N) one-hot
        sc = jnp.sum(jnp.where(sel, scores_all, 0.0), axis=1, keepdims=True)
        if s > 0:                                          # torch.neg on negatives
            sc = -sc
        total = total + _log_sigmoid(sc)                   # EUP, f32

    _write_partial(out_ref, total, _row_mask(tile_n, n_ref))


def _nsloss_pregathered_kernel(n_ref, embs_ref, wflat_ref, out_ref):
    """Fallback: pre-gathered rows in lane-dense (T, (S+1)*E) layout."""
    tile_n, e = embs_ref.shape
    s1 = wflat_ref.shape[1] // e

    embs = embs_ref[...].astype(jnp.float32)               # (T, E) f32 math

    total = jnp.zeros((tile_n, 1), jnp.float32)
    for s in range(s1):                                    # static lane-window slices
        w_s = wflat_ref[:, s * e:(s + 1) * e].astype(jnp.float32)  # (T, E)
        sc = jnp.sum(w_s * embs, axis=1, keepdims=True)
        if s > 0:
            sc = -sc
        total = total + _log_sigmoid(sc)

    _write_partial(out_ref, total, _row_mask(tile_n, n_ref))


def _vmem_limit_bytes():
    # Leave generous headroom: v7x has only 64 MiB physical VMEM per core,
    # v5e's default scoped limit is 16 MiB and must be raised explicitly.
    try:
        cap = int(pltpu.get_tpu_info().vmem_capacity_bytes)
    except Exception:
        cap = 64 << 20                                     # conservative (v7x)
    return int(min(cap * 2 // 5, 48 << 20))


def _pick_tile_n(n, per_row_bytes, budget_bytes, cap_rows):
    rows = budget_bytes // max(per_row_bytes, 1)
    rows = min(int(cap_rows), _TILE_ROW_CAP, int(rows))
    rows = max(32, (rows // 32) * 32)                      # 32 covers f32/bf16 packing
    if n <= rows:
        return n, 1                  # single full-dim block -> no ragged edge at all
    return rows, pl.cdiv(n, rows)


def nsloss_pallas(embs, weights, idx_all, *, transport_dtype=jnp.bfloat16,
                  force_pregathered=False, max_tile_rows=_TILE_ROW_CAP):
    """embs: (n, E) activations; weights: (num_nodes, E) embedding table;
    idx_all: (n, S+1) with column 0 = label and columns 1.. = sampled negatives.
    Returns the scalar f32 NS loss.  `max_tile_rows` is a test hook."""
    n, e = embs.shape
    s1 = idx_all.shape[1]
    num_nodes = weights.shape[0]

    # bf16 over HBM (the kernel is bandwidth bound); all math is f32 in-kernel.
    embs_t = embs.astype(transport_dtype)
    idx_all = idx_all.astype(jnp.int32)
    n_smem = jnp.array([n], dtype=jnp.int32)

    t_item = jnp.dtype(transport_dtype).itemsize
    e_lanes = _round_up(e, _LANES)
    vmem_limit = _vmem_limit_bytes()

    table_bytes = _round_up(num_nodes, _SUBLANES) * e_lanes * t_item
    use_fused = (not force_pregathered
                 and num_nodes <= _FUSED_MAX_NODES
                 and table_bytes <= _FUSED_MAX_TABLE_BYTES)

    compiler_params = pltpu.CompilerParams(
        dimension_semantics=("parallel",),                 # megacore-shard the batch
        vmem_limit_bytes=vmem_limit)

    if use_fused:
        w_t = weights.astype(transport_dtype)
        n_lanes = _round_up(num_nodes, _LANES)
        # Padded-VMEM accounting: DMA tiles are double-buffered (x2); the f32
        # (T, N) working set (scores_all / one-hot temps) is counted once.
        dma_row = e_lanes * t_item + _LANES * 4            # embs row + lane-padded idx row
        work_row = e_lanes * 4 + 4 * n_lanes * 4
        budget = vmem_limit - 2 * table_bytes - (2 << 20)
        tile_n, n_tiles = _pick_tile_n(n, 2 * dma_row + work_row, budget,
                                       max_tile_rows)

        partials = pl.pallas_call(
            _nsloss_fused_kernel,
            out_shape=jax.ShapeDtypeStruct((n_tiles, _SUBLANES, _LANES),
                                           jnp.float32),
            grid=(n_tiles,),
            in_specs=[
                pl.BlockSpec(memory_space=pltpu.MemorySpace.SMEM),    # n (scalar)
                pl.BlockSpec((tile_n, s1), lambda i: (i, 0)),         # idx tile
                pl.BlockSpec((tile_n, e), lambda i: (i, 0)),          # embs tile
                pl.BlockSpec((num_nodes, e), lambda i: (0, 0)),       # table (resident)
            ],
            out_specs=pl.BlockSpec((1, _SUBLANES, _LANES), lambda i: (i, 0, 0)),
            compiler_params=compiler_params,
        )(n_smem, idx_all, embs_t, w_t)
    else:
        # Large-table fallback: gather stays in XLA, but ship bf16 and a
        # lane-dense (n, (S+1)*E) layout (free contiguous reshape).
        w_all = jnp.take(weights.astype(transport_dtype), idx_all, axis=0)
        wflat = w_all.reshape(n, s1 * e)

        dma_row = (e_lanes + _round_up(s1 * e, _LANES)) * t_item
        work_row = 3 * e_lanes * 4
        budget = vmem_limit - (2 << 20)
        tile_n, n_tiles = _pick_tile_n(n, 2 * dma_row + work_row, budget,
                                       max_tile_rows)

        partials = pl.pallas_call(
            _nsloss_pregathered_kernel,
            out_shape=jax.ShapeDtypeStruct((n_tiles, _SUBLANES, _LANES),
                                           jnp.float32),
            grid=(n_tiles,),
            in_specs=[
                pl.BlockSpec(memory_space=pltpu.MemorySpace.SMEM),    # n (scalar)
                pl.BlockSpec((tile_n, e), lambda i: (i, 0)),          # embs tile
                pl.BlockSpec((tile_n, s1 * e), lambda i: (i, 0)),     # gathered rows
            ],
            out_specs=pl.BlockSpec((1, _SUBLANES, _LANES), lambda i: (i, 0, 0)),
            compiler_params=compiler_params,
        )(n_smem, embs_t, wflat)

    # Tiny final reduction + normalization outside the kernel.
    return -(jnp.sum(partials[:, 0, 0]) / n)


class NSLossJax:
    """JAX/Pallas port of the PyTorch NSLoss module (forward pass)."""

    def __init__(self, num_nodes, num_sampled, embedding_size, key,
                 transport_dtype=jnp.bfloat16):
        self.num_nodes = num_nodes
        self.num_sampled = num_sampled
        self.embedding_size = embedding_size
        self.transport_dtype = transport_dtype

        # sample_weights = F.normalize([(log(k+2)-log(k+1))/log(num_nodes+1)], dim=0)
        k = jnp.arange(num_nodes, dtype=jnp.float32)
        w = (jnp.log(k + 2.0) - jnp.log(k + 1.0)) / math.log(num_nodes + 1)
        self.sample_weights = w / jnp.sqrt(jnp.sum(w * w))

        # nn.Embedding weight ~ Normal(0, 1/sqrt(embedding_size))
        self.weights = jax.random.normal(
            key, (num_nodes, embedding_size), dtype=jnp.float32
        ) * (1.0 / math.sqrt(embedding_size))

    def sample_negs(self, key, n):
        # torch.multinomial(sample_weights, num_sampled*n, replacement=True)
        probs = self.sample_weights / jnp.sum(self.sample_weights)
        return jax.random.choice(
            key, self.num_nodes, shape=(n, self.num_sampled), replace=True, p=probs)

    def __call__(self, inp, embs, label, key, force_pregathered=False):
        n = inp.shape[0]
        negs = self.sample_negs(key, n)
        idx_all = jnp.concatenate([label[:, None], negs], axis=1).astype(jnp.int32)
        return nsloss_pallas(embs, self.weights, idx_all,
                             transport_dtype=self.transport_dtype,
                             force_pregathered=force_pregathered)


def _nsloss_reference(embs, weights, idx_all):
    """Pure-JAX reference identical to the PyTorch forward (f32 math)."""
    n = embs.shape[0]
    w_all = weights[idx_all]                                # (n, S+1, E)
    pos = jnp.sum(embs * w_all[:, 0, :], axis=1)
    neg = -jnp.einsum("nse,ne->ns", w_all[:, 1:, :], embs)
    loss = jax.nn.log_sigmoid(pos) + jnp.sum(jax.nn.log_sigmoid(neg), axis=1)
    return -jnp.sum(loss) / n


if __name__ == "__main__":
    key = jax.random.PRNGKey(0)
    (k_w, k_e, k_l, k_neg, k_e2, k_l2, k_neg2,
     k_e4, k_l4, k_neg4) = jax.random.split(key, 10)

    num_nodes = 50
    num_sampled = 5
    embedding_size = 32

    model = NSLossJax(num_nodes, num_sampled, embedding_size, k_w)

    # The kernel ships bf16 over HBM; compare against an f32 reference run on
    # the same bf16-quantized values so the check stays tight.
    def quant(x):
        return x.astype(model.transport_dtype).astype(jnp.float32)

    def ref_loss(embs, idx_all):
        return _nsloss_reference(quant(embs), quant(model.weights), idx_all)

    # Case 1: n = 8 -- fused-gather path, single tile.
    n = 8
    inp = jnp.arange(n, dtype=jnp.int32)
    embs = jax.random.normal(k_e, (n, embedding_size), dtype=jnp.float32)
    label = jax.random.randint(k_l, (n,), 0, num_nodes, dtype=jnp.int32)
    loss = jax.block_until_ready(model(inp, embs, label, k_neg))
    idx1 = jnp.concatenate([label[:, None], model.sample_negs(k_neg, n)], axis=1)
    ref = ref_loss(embs, idx1)
    assert jnp.isfinite(loss), "fused loss is not finite"
    assert jnp.allclose(loss, ref, rtol=1e-3, atol=1e-3), (loss, ref)

    # Case 2: n = 20 -- fused path, odd batch size (full-dim single block).
    n2 = 20
    inp2 = jnp.arange(n2, dtype=jnp.int32)
    embs2 = jax.random.normal(k_e2, (n2, embedding_size), dtype=jnp.float32)
    label2 = jax.random.randint(k_l2, (n2,), 0, num_nodes, dtype=jnp.int32)
    loss2 = jax.block_until_ready(model(inp2, embs2, label2, k_neg2))
    idx2 = jnp.concatenate([label2[:, None], model.sample_negs(k_neg2, n2)], axis=1)
    ref2 = ref_loss(embs2, idx2)
    assert jnp.isfinite(loss2), "fused loss (n=20) is not finite"
    assert jnp.allclose(loss2, ref2, rtol=1e-3, atol=1e-3), (loss2, ref2)

    # Case 3: pre-gathered fallback (large-table path) on the same data.
    loss3 = jax.block_until_ready(
        model(inp2, embs2, label2, k_neg2, force_pregathered=True))
    assert jnp.isfinite(loss3), "pre-gathered loss is not finite"
    assert jnp.allclose(loss3, ref2, rtol=1e-3, atol=1e-3), (loss3, ref2)

    # Case 4: n = 40 with a forced 32-row tile -> multi-tile grid with a
    # ragged, mask-handled last block (exercises the no-pad path), both kernels.
    n4 = 40
    embs4 = jax.random.normal(k_e4, (n4, embedding_size), dtype=jnp.float32)
    label4 = jax.random.randint(k_l4, (n4,), 0, num_nodes, dtype=jnp.int32)
    idx4 = jnp.concatenate([label4[:, None], model.sample_negs(k_neg4, n4)],
                           axis=1).astype(jnp.int32)
    ref4 = ref_loss(embs4, idx4)
    loss4 = jax.block_until_ready(
        nsloss_pallas(embs4, model.weights, idx4, max_tile_rows=32))
    loss5 = jax.block_until_ready(
        nsloss_pallas(embs4, model.weights, idx4, max_tile_rows=32,
                      force_pregathered=True))
    assert jnp.isfinite(loss4) and jnp.isfinite(loss5), "ragged-tile loss not finite"
    assert jnp.allclose(loss4, ref4, rtol=1e-3, atol=1e-3), (loss4, ref4)
    assert jnp.allclose(loss5, ref4, rtol=1e-3, atol=1e-3), (loss5, ref4)

    print("KERNEL_OK")
</pallas_src>

<mosaic_0001>
module attributes {stable_mosaic.version = 11 : i64} {
  func.func @_nsloss_fused_kernel(%arg0: i32, %arg1: memref<1xi32, #tpu.memory_space<smem>>, %arg2: memref<8x6xi32, #tpu.memory_space<vmem>>, %arg3: memref<8x32xbf16, #tpu.memory_space<vmem>>, %arg4: memref<50x32xbf16, #tpu.memory_space<vmem>>, %arg5: memref<1x8x128xf32, #tpu.memory_space<vmem>>) attributes {dimension_semantics = [#tpu.dimension_semantics<parallel>], iteration_bounds = array<i64: 1>, scalar_prefetch = 0 : i64, scratch_operands = 0 : i64, tpu.core_type = #tpu.core_type<tc>, window_params = [{transform_indices = @transform_0, window_bounds = array<i64: 1>}, {transform_indices = @transform_1, window_bounds = array<i64: 8, 6>}, {transform_indices = @transform_2, window_bounds = array<i64: 8, 32>}, {pipeline_mode = #tpu.pipeline_mode<synchronous>, transform_indices = @transform_3, window_bounds = array<i64: 50, 32>}, {transform_indices = @transform_4, window_bounds = array<i64: 1, 8, 128>}]} {
    %c0 = arith.constant 0 : index
    %c0_0 = arith.constant 0 : index
    %0 = vector.load %arg3[%c0, %c0_0] : memref<8x32xbf16, #tpu.memory_space<vmem>>, vector<8x32xbf16>
    %c0_1 = arith.constant 0 : index
    %c0_2 = arith.constant 0 : index
    %1 = vector.load %arg4[%c0_1, %c0_2] : memref<50x32xbf16, #tpu.memory_space<vmem>>, vector<50x32xbf16>
    %cst = arith.constant dense<0.000000e+00> : vector<8x50xf32>
    %2 = tpu.matmul %0, %1, %cst {dimension_numbers = #tpu.dot_dimension_numbers<[1], [1], [0], [0], [0, 0, 1, 0], [], []>} : vector<8x32xbf16>, vector<50x32xbf16>, vector<8x50xf32> -> vector<8x50xf32>
    %3 = tpu.iota {dimensions = array<i32: 1>} : vector<8x50xi32>
    %cst_3 = arith.constant 0.000000e+00 : f32
    %4 = vector.broadcast %cst_3 : f32 to vector<8x1xf32>
    %c0_4 = arith.constant 0 : index
    %c0_5 = arith.constant 0 : index
    %5 = vector.load %arg2[%c0_4, %c0_5] : memref<8x6xi32, #tpu.memory_space<vmem>>, vector<8x1xi32>
    %6 = vector.broadcast %5 : vector<8x1xi32> to vector<8x50xi32>
    %7 = arith.cmpi eq, %6, %3 : vector<8x50xi32>
    %cst_6 = arith.constant 0.000000e+00 : f32
    %8 = vector.broadcast %cst_6 : f32 to vector<8x50xf32>
    %9 = arith.select %7, %2, %8 : vector<8x50xi1>, vector<8x50xf32>
    %cst_7 = arith.constant dense<0.000000e+00> : vector<8xf32>
    %10 = vector.multi_reduction <add>, %9, %cst_7 [1] : vector<8x50xf32> to vector<8xf32>
    %11 = vector.shape_cast %10 : vector<8xf32> to vector<8x1xf32>
    %cst_8 = arith.constant 0.000000e+00 : f32
    %12 = vector.broadcast %cst_8 : f32 to vector<8x1xf32>
    %13 = arith.minimumf %11, %12 : vector<8x1xf32>
    %14 = math.absf %11 : vector<8x1xf32>
    %cst_9 = arith.constant 0.000000e+00 : f32
    %15 = vector.broadcast %cst_9 : f32 to vector<8x1xf32>
    %16 = arith.subf %15, %14 : vector<8x1xf32>
    %17 = math.exp %16 : vector<8x1xf32>
    %18 = math.log1p %17 : vector<8x1xf32>
    %19 = arith.subf %13, %18 : vector<8x1xf32>
    %20 = arith.addf %4, %19 : vector<8x1xf32>
    %c0_10 = arith.constant 0 : index
    %c1 = arith.constant 1 : index
    %21 = vector.load %arg2[%c0_10, %c1] : memref<8x6xi32, #tpu.memory_space<vmem>>, vector<8x1xi32>
    %22 = vector.broadcast %21 : vector<8x1xi32> to vector<8x50xi32>
    %23 = arith.cmpi eq, %22, %3 : vector<8x50xi32>
    %cst_11 = arith.constant 0.000000e+00 : f32
    %24 = vector.broadcast %cst_11 : f32 to vector<8x50xf32>
    %25 = arith.select %23, %2, %24 : vector<8x50xi1>, vector<8x50xf32>
    %cst_12 = arith.constant dense<0.000000e+00> : vector<8xf32>
    %26 = vector.multi_reduction <add>, %25, %cst_12 [1] : vector<8x50xf32> to vector<8xf32>
    %27 = vector.shape_cast %26 : vector<8xf32> to vector<8x1xf32>
    %cst_13 = arith.constant 0.000000e+00 : f32
    %28 = vector.broadcast %cst_13 : f32 to vector<8x1xf32>
    %29 = arith.subf %28, %27 : vector<8x1xf32>
    %cst_14 = arith.constant 0.000000e+00 : f32
    %30 = vector.broadcast %cst_14 : f32 to vector<8x1xf32>
    %31 = arith.minimumf %29, %30 : vector<8x1xf32>
    %32 = math.absf %29 : vector<8x1xf32>
    %cst_15 = arith.constant 0.000000e+00 : f32
    %33 = vector.broadcast %cst_15 : f32 to vector<8x1xf32>
    %34 = arith.subf %33, %32 : vector<8x1xf32>
    %35 = math.exp %34 : vector<8x1xf32>
    %36 = math.log1p %35 : vector<8x1xf32>
    %37 = arith.subf %31, %36 : vector<8x1xf32>
    %38 = arith.addf %20, %37 : vector<8x1xf32>
    %c0_16 = arith.constant 0 : index
    %c2 = arith.constant 2 : index
    %39 = vector.load %arg2[%c0_16, %c2] : memref<8x6xi32, #tpu.memory_space<vmem>>, vector<8x1xi32>
    %40 = vector.broadcast %39 : vector<8x1xi32> to vector<8x50xi32>
    %41 = arith.cmpi eq, %40, %3 : vector<8x50xi32>
    %cst_17 = arith.constant 0.000000e+00 : f32
    %42 = vector.broadcast %cst_17 : f32 to vector<8x50xf32>
    %43 = arith.select %41, %2, %42 : vector<8x50xi1>, vector<8x50xf32>
    %cst_18 = arith.constant dense<0.000000e+00> : vector<8xf32>
    %44 = vector.multi_reduction <add>, %43, %cst_18 [1] : vector<8x50xf32> to vector<8xf32>
    %45 = vector.shape_cast %44 : vector<8xf32> to vector<8x1xf32>
    %cst_19 = arith.constant 0.000000e+00 : f32
    %46 = vector.broadcast %cst_19 : f32 to vector<8x1xf32>
    %47 = arith.subf %46, %45 : vector<8x1xf32>
    %cst_20 = arith.constant 0.000000e+00 : f32
    %48 = vector.broadcast %cst_20 : f32 to vector<8x1xf32>
    %49 = arith.minimumf %47, %48 : vector<8x1xf32>
    %50 = math.absf %47 : vector<8x1xf32>
    %cst_21 = arith.constant 0.000000e+00 : f32
    %51 = vector.broadcast %cst_21 : f32 to vector<8x1xf32>
    %52 = arith.subf %51, %50 : vector<8x1xf32>
    %53 = math.exp %52 : vector<8x1xf32>
    %54 = math.log1p %53 : vector<8x1xf32>
    %55 = arith.subf %49, %54 : vector<8x1xf32>
    %56 = arith.addf %38, %55 : vector<8x1xf32>
    %c0_22 = arith.constant 0 : index
    %c3 = arith.constant 3 : index
    %57 = vector.load %arg2[%c0_22, %c3] : memref<8x6xi32, #tpu.memory_space<vmem>>, vector<8x1xi32>
    %58 = vector.broadcast %57 : vector<8x1xi32> to vector<8x50xi32>
    %59 = arith.cmpi eq, %58, %3 : vector<8x50xi32>
    %cst_23 = arith.constant 0.000000e+00 : f32
    %60 = vector.broadcast %cst_23 : f32 to vector<8x50xf32>
    %61 = arith.select %59, %2, %60 : vector<8x50xi1>, vector<8x50xf32>
    %cst_24 = arith.constant dense<0.000000e+00> : vector<8xf32>
    %62 = vector.multi_reduction <add>, %61, %cst_24 [1] : vector<8x50xf32> to vector<8xf32>
    %63 = vector.shape_cast %62 : vector<8xf32> to vector<8x1xf32>
    %cst_25 = arith.constant 0.000000e+00 : f32
    %64 = vector.broadcast %cst_25 : f32 to vector<8x1xf32>
    %65 = arith.subf %64, %63 : vector<8x1xf32>
    %cst_26 = arith.constant 0.000000e+00 : f32
    %66 = vector.broadcast %cst_26 : f32 to vector<8x1xf32>
    %67 = arith.minimumf %65, %66 : vector<8x1xf32>
    %68 = math.absf %65 : vector<8x1xf32>
    %cst_27 = arith.constant 0.000000e+00 : f32
    %69 = vector.broadcast %cst_27 : f32 to vector<8x1xf32>
    %70 = arith.subf %69, %68 : vector<8x1xf32>
    %71 = math.exp %70 : vector<8x1xf32>
    %72 = math.log1p %71 : vector<8x1xf32>
    %73 = arith.subf %67, %72 : vector<8x1xf32>
    %74 = arith.addf %56, %73 : vector<8x1xf32>
    %c0_28 = arith.constant 0 : index
    %c4 = arith.constant 4 : index
    %75 = vector.load %arg2[%c0_28, %c4] : memref<8x6xi32, #tpu.memory_space<vmem>>, vector<8x1xi32>
    %76 = vector.broadcast %75 : vector<8x1xi32> to vector<8x50xi32>
    %77 = arith.cmpi eq, %76, %3 : vector<8x50xi32>
    %cst_29 = arith.constant 0.000000e+00 : f32
    %78 = vector.broadcast %cst_29 : f32 to vector<8x50xf32>
    %79 = arith.select %77, %2, %78 : vector<8x50xi1>, vector<8x50xf32>
    %cst_30 = arith.constant dense<0.000000e+00> : vector<8xf32>
    %80 = vector.multi_reduction <add>, %79, %cst_30 [1] : vector<8x50xf32> to vector<8xf32>
    %81 = vector.shape_cast %80 : vector<8xf32> to vector<8x1xf32>
    %cst_31 = arith.constant 0.000000e+00 : f32
    %82 = vector.broadcast %cst_31 : f32 to vector<8x1xf32>
    %83 = arith.subf %82, %81 : vector<8x1xf32>
    %cst_32 = arith.constant 0.000000e+00 : f32
    %84 = vector.broadcast %cst_32 : f32 to vector<8x1xf32>
    %85 = arith.minimumf %83, %84 : vector<8x1xf32>
    %86 = math.absf %83 : vector<8x1xf32>
    %cst_33 = arith.constant 0.000000e+00 : f32
    %87 = vector.broadcast %cst_33 : f32 to vector<8x1xf32>
    %88 = arith.subf %87, %86 : vector<8x1xf32>
    %89 = math.exp %88 : vector<8x1xf32>
    %90 = math.log1p %89 : vector<8x1xf32>
    %91 = arith.subf %85, %90 : vector<8x1xf32>
    %92 = arith.addf %74, %91 : vector<8x1xf32>
    %c0_34 = arith.constant 0 : index
    %c5 = arith.constant 5 : index
    %93 = vector.load %arg2[%c0_34, %c5] : memref<8x6xi32, #tpu.memory_space<vmem>>, vector<8x1xi32>
    %94 = vector.broadcast %93 : vector<8x1xi32> to vector<8x50xi32>
    %95 = arith.cmpi eq, %94, %3 : vector<8x50xi32>
    %cst_35 = arith.constant 0.000000e+00 : f32
    %96 = vector.broadcast %cst_35 : f32 to vector<8x50xf32>
    %97 = arith.select %95, %2, %96 : vector<8x50xi1>, vector<8x50xf32>
    %cst_36 = arith.constant dense<0.000000e+00> : vector<8xf32>
    %98 = vector.multi_reduction <add>, %97, %cst_36 [1] : vector<8x50xf32> to vector<8xf32>
    %99 = vector.shape_cast %98 : vector<8xf32> to vector<8x1xf32>
    %cst_37 = arith.constant 0.000000e+00 : f32
    %100 = vector.broadcast %cst_37 : f32 to vector<8x1xf32>
    %101 = arith.subf %100, %99 : vector<8x1xf32>
    %cst_38 = arith.constant 0.000000e+00 : f32
    %102 = vector.broadcast %cst_38 : f32 to vector<8x1xf32>
    %103 = arith.minimumf %101, %102 : vector<8x1xf32>
    %104 = math.absf %101 : vector<8x1xf32>
    %cst_39 = arith.constant 0.000000e+00 : f32
    %105 = vector.broadcast %cst_39 : f32 to vector<8x1xf32>
    %106 = arith.subf %105, %104 : vector<8x1xf32>
    %107 = math.exp %106 : vector<8x1xf32>
    %108 = math.log1p %107 : vector<8x1xf32>
    %109 = arith.subf %103, %108 : vector<8x1xf32>
    %110 = arith.addf %92, %109 : vector<8x1xf32>
    %c8_i32 = arith.constant 8 : i32
    %111 = arith.muli %arg0, %c8_i32 : i32
    %112 = tpu.iota {dimensions = array<i32: 0>} : vector<8x1xi32>
    %113 = vector.broadcast %111 : i32 to vector<8x1xi32>
    %114 = arith.addi %113, %112 : vector<8x1xi32>
    %c0_40 = arith.constant 0 : index
    %115 = memref.load %arg1[%c0_40] : memref<1xi32, #tpu.memory_space<smem>>
    %116 = vector.broadcast %115 : i32 to vector<8x1xi32>
    %117 = arith.cmpi slt, %114, %116 : vector<8x1xi32>
    %cst_41 = arith.constant 0.000000e+00 : f32
    %118 = vector.broadcast %cst_41 : f32 to vector<8x1xf32>
    %119 = arith.select %117, %110, %118 : vector<8x1xi1>, vector<8x1xf32>
    %cst_42 = arith.constant dense<0.000000e+00> : vector<1xf32>
    %120 = vector.multi_reduction <add>, %119, %cst_42 [0] : vector<8x1xf32> to vector<1xf32>
    %121 = vector.shape_cast %120 : vector<1xf32> to vector<1x1xf32>
    %122 = vector.shape_cast %121 : vector<1x1xf32> to vector<1x1x1xf32>
    %123 = vector.shape_cast %122 : vector<1x1x1xf32> to vector<1x1x1xf32>
    %124 = vector.broadcast %123 : vector<1x1x1xf32> to vector<1x8x128xf32>
    %c0_43 = arith.constant 0 : index
    %c0_44 = arith.constant 0 : index
    %c0_45 = arith.constant 0 : index
    %125 = vector.load %arg5[%c0_43, %c0_44, %c0_45] : memref<1x8x128xf32, #tpu.memory_space<vmem>>, vector<1x8x128xf32>
    tpu.vector_store %arg5[%c0_43, %c0_44, %c0_45], %124 {strides = array<i32>} : memref<1x8x128xf32, #tpu.memory_space<vmem>>, vector<1x8x128xf32>,
    return
  }
  func.func @transform_0(%arg0: i32) -> i32 {
    %c0_i32 = arith.constant 0 : i32
    %c0_i32_0 = arith.constant 0 : i32
    return %c0_i32 : i32
  }
  func.func @transform_1(%arg0: i32) -> (i32, i32) {
    %c0_i32 = arith.constant 0 : i32
    %c0_i32_0 = arith.constant 0 : i32
    return %arg0, %c0_i32 : i32, i32
  }
  func.func @transform_2(%arg0: i32) -> (i32, i32) {
    %c0_i32 = arith.constant 0 : i32
    %c0_i32_0 = arith.constant 0 : i32
    return %arg0, %c0_i32 : i32, i32
  }
  func.func @transform_3(%arg0: i32) -> (i32, i32) {
    %c0_i32 = arith.constant 0 : i32
    %c0_i32_0 = arith.constant 0 : i32
    %c0_i32_1 = arith.constant 0 : i32
    return %c0_i32, %c0_i32_0 : i32, i32
  }
  func.func @transform_4(%arg0: i32) -> (i32, i32, i32) {
    %c0_i32 = arith.constant 0 : i32
    %c0_i32_0 = arith.constant 0 : i32
    %c0_i32_1 = arith.constant 0 : i32
    return %arg0, %c0_i32, %c0_i32_0 : i32, i32, i32
  }
}

</mosaic_0001>

<llo_original>
// kernel: tpu_custom_call.1
$region0: #{tpu_custom_call.1}
  #allocation0 [shape = 'u32[]', space=smem, size = 0x4, offset = 0x4, fixed_abs, tag = 'smem constant byte address 0x4 - core index']
  #allocation1 [shape = 'u32[144,128]{1,0:T(1,128)}', space=vmem, size = 0x12000, scoped, tag = 'internal scratch']
  #allocation2 [shape = 's32[1]{0:T(128)S(6)}', space=smem, size = 0x200, scoped, tag = 'scoped memory for tpu_custom_call.1']
  %s0 = inlined_call_operand.<no memory space> [shape: s32[1], index: 0, kind: input, shape index: {}]
  %s1 = inlined_call_operand.vmem [shape: s32[8,6], index: 1, kind: input, shape index: {}]
  %s2 = inlined_call_operand.vmem [shape: bf16[8,32], index: 2, kind: input, shape index: {}]
  %s3 = inlined_call_operand.vmem [shape: bf16[50,32], index: 3, kind: input, shape index: {}]
  %s4 = inlined_call_operand.hbm [shape: f32[1,8,128], index: 4, kind: output, shape index: {}]
  %s5 = sld [smem:[#allocation0]]
  $region26: #{tpu_custom_call.1} parent=0
    _
  %s7 = ssub.s32 1, %s5
  %s8 = scalar_select 0, %s7, %s5
  %9 = sst [smem:[#allocation2]] %s0
  $region1: #{tpu_custom_call.1} parent=0
    #allocation3 [shape = 'u8[4096]{0}', space=vmem, size = 0x1000, scoped, tag = 'output window, operand 0, single buffered']
    #allocation4 [shape = 's32[1]{0}', space=sflag, size = 0x4, scoped, tag = 'scoped memory for tpu_custom_call.1']
    %10 = vsyncpa [#allocation4], 0
    // Predicated region
    $region2: #{tpu_custom_call.1} parent=1 // pred_check
      _
    $region3: #{tpu_custom_call.1} parent=1 // pred_check_branch
      %12 = sbr.rel (0) target = $region5
    $region4: #{tpu_custom_call.1} parent=1 // pred_region
      _
    $region5: #{tpu_custom_call.1} parent=1 // pred_fallthru
      _
    // Predicated region
    $region6: #{tpu_custom_call.1} parent=1 // pred_check
      _
    $region7: #{tpu_custom_call.1} parent=1 // pred_check_branch
      %14 = sbr.rel (0) target = $region9
    $region8: #{tpu_custom_call.1} parent=1 // pred_region
      _
    $region9: #{tpu_custom_call.1} parent=1 // pred_fallthru
      _
    // Predicated region
    $region10: #{tpu_custom_call.1} parent=1 // pred_check
      _
    $region11: #{tpu_custom_call.1} parent=1 // pred_check_branch
      %16 = sbr.rel (0) target = $region13
    $region12: #{tpu_custom_call.1} parent=1 // pred_region
      _
    $region13: #{tpu_custom_call.1} parent=1 // pred_fallthru
      _
    // Predicated region
    $region14: #{tpu_custom_call.1} parent=1 // pred_check
      _
    $region15: #{tpu_custom_call.1} parent=1 // pred_check_branch
      %18 = sbr.rel (0) target = $region17
    $region16: #{tpu_custom_call.1} parent=1 // pred_region
      _
    $region17: #{tpu_custom_call.1} parent=1 // pred_fallthru
      _
    %v20 = vld [vmem:[%s2] sm:$0xf]
    %v21 = vld [vmem:[%s3] sm:$0xf]
    %v22 = vld [vmem:[%s3 + $0x4] sm:$0xf]
    %v23 = vld [vmem:[%s3 + $0x8] sm:$0xf]
    %v24 = vld [vmem:[%s3 + $0xc] sm:$0xf]
    %v25 = vld [vmem:[%s3 + $0x10] sm:$0xf]
    %v26 = vld [vmem:[%s3 + $0x14] sm:$0xf]
    %v27 = vld [vmem:[%s3 + $0x18] sm:$0x1]
    %v35 = vunpack.c.l.b16 %v21
    %v36 = vunpack.c.l.b16 %v22
    %v37 = vunpack.c.l.b16 %v23
    %v38 = vunpack.c.l.b16 %v24
    %v39 = vunpack.c.l.b16 %v25
    %v40 = vunpack.c.l.b16 %v26
    %v41 = vunpack.c.l.b16 %v27
    %v42 = vpack.c.b16 %v36, %v35
    %v43 = vpack.c.b16 %v38, %v37
    %v44 = vpack.c.b16 %v40, %v39
    %v45 = vpack.c.b16 %v41, %v41
    %vm46 = vcmask 261120
    %v48 = vsel %vm46, %v20, 0
    %v51 = vsel %vm46, %v42, 0
    %v54 = vsel %vm46, %v43, 0
    %v57 = vsel %vm46, %v44, 0
    %v60 = vsel %vm46, %v45, 0
    %62 = vmatprep.subr.bf16.mxu0 0
    %63 = vmatpush1.bf16.xpose.msra.mxu0 %v51
    %64 = vmatprep.subr.bf16.mxu0 0
    %65 = vmatpush1.bf16.xpose.msra.mxu0 %v54
    %66 = vmatprep.subr.bf16.mxu0 0
    %67 = vmatpush1.bf16.xpose.msra.mxu0 %v57
    %68 = vmatprep.subr.bf16.mxu0 0
    %69 = vmatpush1.bf16.xpose.msra.mxu0 %v60
    %70 = vmatprep.subr.bf16.mxu0 0
    %71 = vmatpush1.bf16.xpose.msra.mxu0 0
    %72 = vmatprep.subr.bf16.mxu0 0
    %73 = vmatpush1.bf16.xpose.msra.mxu0 0
    %74 = vmatprep.subr.bf16.mxu0 0
    %75 = vmatpush1.bf16.xpose.msra.mxu0 0
    %76 = vmatprep.subr.bf16.mxu0 0
    %77 = vmatpush1.bf16.xpose.msra.mxu0 0
    %78 = vmatprep.subr.bf16.mxu0 0
    %79 = vmatpush1.bf16.xpose.msra.mxu0 0
    %80 = vmatprep.subr.bf16.mxu0 0
    %81 = vmatpush1.bf16.xpose.msra.mxu0 0
    %82 = vmatprep.subr.bf16.mxu0 0
    %83 = vmatpush1.bf16.xpose.msra.mxu0 0
    %84 = vmatprep.subr.bf16.mxu0 0
    %85 = vmatpush1.bf16.xpose.msra.mxu0 0
    %86 = vmatprep.subr.bf16.mxu0 0
    %87 = vmatpush1.bf16.xpose.msra.mxu0 0
    %88 = vmatprep.subr.bf16.mxu0 0
    %89 = vmatpush1.bf16.xpose.msra.mxu0 0
    %90 = vmatprep.subr.bf16.mxu0 0
    %91 = vmatpush1.bf16.xpose.msra.mxu0 0
    %92 = vmatprep.subr.bf16.mxu0 0
    %93 = vmatpush1.bf16.xpose.msra.mxu0 0
    %94 = vmatprep.mubr.bf16.mxu0 0
    %95 = vmatmul.mubr.bf16.gmra.mrb[0].mxu0 %v48
    %v96 = vpop.f32.mrb[0].mxu0
    %v97 = vadd.f32 0.0, %v96
    %v98 = vpop.f32.mrb[0].mxu0
    %v99 = vpop.f32.mrb[0].mxu0
    %v100 = vpop.f32.mrb[0].mxu0
    %101 = vdwg.mxu0
    %v102 = vlaneseq
    %v103 = vand.u32 %v102, 127
    %v104 = vld [vmem:[%s1] sm:$0xff]
    %105 = vset.pattern.permute.xlu0 0
    %106 = vperm.xlu0 %105, %v104
    %v107 = vpop.permute.xlu0 %106
    %vm108 = vcmp.eq.s32.totalorder %v107, %v103
    %v109 = vsel %vm108, %v97, 0.0
    %vm110 = vcmask 408576
    %v111 = vsel %vm110, %v109, 0.0
    %112 = vadd.xlane.f32.xlu0 %v111
    %v113 = vpop.xlane.xlu0 %112
    %v114 = vmin.f32 %v113, 0.0
    %v115 = vand.u32 2147483647, %v113
    %v116 = vsub.f32 0.0, %v115
    %v117 = vmul.f32 %v116, 1.442695
    %v118 = vpow.pop %v117
    %v119 = vadd.f32 %v118, 1.0
    %v120 = vlog2.pop %v119
    %v121 = vmul.f32 %v120, 0.6931472
    %v122 = vmul.f32 -0.5, %v118
    %v123 = vadd.f32 %v122, 1.0
    %v124 = vmul.f32 %v123, %v118
    %v125 = vand.u32 2147483647, %v118
    %vm126 = vcmp.lt.f32.partialorder %v125, 0.0004427343
    %v127 = vsel %vm126, %v124, %v121
    %v128 = vsub.f32 %v114, %v127
    %v129 = vadd.f32 %v128, 0.0
    %130 = vset.pattern.permute.xlu0 1
    %131 = vperm.xlu0 %130, %v104
    %v132 = vpop.permute.xlu0 %131
    %vm133 = vcmp.eq.s32.totalorder %v132, %v103
    %v134 = vsel %vm133, %v97, 0.0
    %v135 = vsel %vm110, %v134, 0.0
    %136 = vadd.xlane.f32.xlu0 %v135
    %v137 = vpop.xlane.xlu0 %136
    %v138 = vsub.f32 0.0, %v137
    %v139 = vmin.f32 %v138, 0.0
    %v140 = vand.u32 2147483647, %v138
    %v141 = vsub.f32 0.0, %v140
    %v142 = vmul.f32 %v141, 1.442695
    %v143 = vpow.pop %v142
    %v144 = vadd.f32 %v143, 1.0
    %v145 = vlog2.pop %v144
    %v146 = vmul.f32 %v145, 0.6931472
    %v147 = vmul.f32 -0.5, %v143
    %v148 = vadd.f32 %v147, 1.0
    %v149 = vmul.f32 %v148, %v143
    %v150 = vand.u32 2147483647, %v143
    %vm151 = vcmp.lt.f32.partialorder %v150, 0.0004427343
    %v152 = vsel %vm151, %v149, %v146
    %v153 = vsub.f32 %v139, %v152
    %v154 = vadd.f32 %v129, %v153
    %155 = vset.pattern.permute.xlu0 2
    %156 = vperm.xlu0 %155, %v104
    %v157 = vpop.permute.xlu0 %156
    %vm158 = vcmp.eq.s32.totalorder %v157, %v103
    %v159 = vsel %vm158, %v97, 0.0
    %v160 = vsel %vm110, %v159, 0.0
    %161 = vadd.xlane.f32.xlu0 %v160
    %v162 = vpop.xlane.xlu0 %161
    %v163 = vsub.f32 0.0, %v162
    %v164 = vmin.f32 %v163, 0.0
    %v165 = vand.u32 2147483647, %v163
    %v166 = vsub.f32 0.0, %v165
    %v167 = vmul.f32 %v166, 1.442695
    %v168 = vpow.pop %v167
    %v169 = vadd.f32 %v168, 1.0
    %v170 = vlog2.pop %v169
    %v171 = vmul.f32 %v170, 0.6931472
    %v172 = vmul.f32 -0.5, %v168
    %v173 = vadd.f32 %v172, 1.0
    %v174 = vmul.f32 %v173, %v168
    %v175 = vand.u32 2147483647, %v168
    %vm176 = vcmp.lt.f32.partialorder %v175, 0.0004427343
    %v177 = vsel %vm176, %v174, %v171
    %v178 = vsub.f32 %v164, %v177
    %v179 = vadd.f32 %v154, %v178
    %180 = vset.pattern.permute.xlu0 3
    %181 = vperm.xlu0 %180, %v104
    %v182 = vpop.permute.xlu0 %181
    %vm183 = vcmp.eq.s32.totalorder %v182, %v103
    %v184 = vsel %vm183, %v97, 0.0
    %v185 = vsel %vm110, %v184, 0.0
    %186 = vadd.xlane.f32.xlu0 %v185
    %v187 = vpop.xlane.xlu0 %186
    %v188 = vsub.f32 0.0, %v187
    %v189 = vmin.f32 %v188, 0.0
    %v190 = vand.u32 2147483647, %v188
    %v191 = vsub.f32 0.0, %v190
    %v192 = vmul.f32 %v191, 1.442695
    %v193 = vpow.pop %v192
    %v194 = vadd.f32 %v193, 1.0
    %v195 = vlog2.pop %v194
    %v196 = vmul.f32 %v195, 0.6931472
    %v197 = vmul.f32 -0.5, %v193
    %v198 = vadd.f32 %v197, 1.0
    %v199 = vmul.f32 %v198, %v193
    %v200 = vand.u32 2147483647, %v193
    %vm201 = vcmp.lt.f32.partialorder %v200, 0.0004427343
    %v202 = vsel %vm201, %v199, %v196
    %v203 = vsub.f32 %v189, %v202
    %v204 = vadd.f32 %v179, %v203
    %205 = vset.pattern.permute.xlu0 4
    %206 = vperm.xlu0 %205, %v104
    %v207 = vpop.permute.xlu0 %206
    %vm208 = vcmp.eq.s32.totalorder %v207, %v103
    %v209 = vsel %vm208, %v97, 0.0
    %v210 = vsel %vm110, %v209, 0.0
    %211 = vadd.xlane.f32.xlu0 %v210
    %v212 = vpop.xlane.xlu0 %211
    %v213 = vsub.f32 0.0, %v212
    %v214 = vmin.f32 %v213, 0.0
    %v215 = vand.u32 2147483647, %v213
    %v216 = vsub.f32 0.0, %v215
    %v217 = vmul.f32 %v216, 1.442695
    %v218 = vpow.pop %v217
    %v219 = vadd.f32 %v218, 1.0
    %v220 = vlog2.pop %v219
    %v221 = vmul.f32 %v220, 0.6931472
    %v222 = vmul.f32 -0.5, %v218
    %v223 = vadd.f32 %v222, 1.0
    %v224 = vmul.f32 %v223, %v218
    %v225 = vand.u32 2147483647, %v218
    %vm226 = vcmp.lt.f32.partialorder %v225, 0.0004427343
    %v227 = vsel %vm226, %v224, %v221
    %v228 = vsub.f32 %v214, %v227
    %v229 = vadd.f32 %v204, %v228
    %230 = vset.pattern.permute.xlu0 5
    %231 = vperm.xlu0 %230, %v104
    %v232 = vpop.permute.xlu0 %231
    %vm233 = vcmp.eq.s32.totalorder %v232, %v103
    %v234 = vsel %vm233, %v97, 0.0
    %v235 = vsel %vm110, %v234, 0.0
    %236 = vadd.xlane.f32.xlu0 %v235
    %v237 = vpop.xlane.xlu0 %236
    %v238 = vsub.f32 0.0, %v237
    %v239 = vmin.f32 %v238, 0.0
    %v240 = vand.u32 2147483647, %v238
    %v241 = vsub.f32 0.0, %v240
    %v242 = vmul.f32 %v241, 1.442695
    %v243 = vpow.pop %v242
    %v244 = vadd.f32 %v243, 1.0
    %v245 = vlog2.pop %v244
    %v246 = vmul.f32 %v245, 0.6931472
    %v247 = vmul.f32 -0.5, %v243
    %v248 = vadd.f32 %v247, 1.0
    %v249 = vmul.f32 %v248, %v243
    %v250 = vand.u32 2147483647, %v243
    %vm251 = vcmp.lt.f32.partialorder %v250, 0.0004427343
    %v252 = vsel %vm251, %v249, %v246
    %v253 = vsub.f32 %v239, %v252
    %v254 = vadd.f32 %v229, %v253
    %s255 = smul.u32 0, 8
    %v256 = vlaneseq
    %v257 = vshrl.u32 %v256, 7
    %v258 = vstv %s255
    %v259 = vadd.s32 %v258, %v257
    %s260 = sld [smem:[#allocation2]]
    %v261 = vstv %s260
    %vm262 = vcmp.lt.s32.totalorder %v259, %v261
    %v263 = vsel %vm262, %v254, 0.0
    %v264 = vrot.slane %v263, 4
    %v265 = vadd.f32 %v263, %v264
    %v266 = vrot.slane %v265, 2
    %v267 = vadd.f32 %v265, %v266
    %v268 = vrot.slane %v267, 1
    %v269 = vadd.f32 %v267, %v268
    %270 = vst [vmem:[#allocation3] sm:$0xff] %v269
    // Predicated region
    $region18: #{tpu_custom_call.1} parent=1 // pred_check
      _
    $region19: #{tpu_custom_call.1} parent=1 // pred_check_branch
      %272 = sbr.rel (0) target = $region21
    $region20: #{tpu_custom_call.1} parent=1 // pred_region
      %s274 = ssub.s32 128, 128
      %275 = vsyncadd [#allocation4], %s274
      %s277 = sshll.u32 [#allocation3], 4
      %s278 = int_to_ptr.vmem [resolvable:$true] %s277
      %280 = dma.vmem_to_hbm [thread:$0]  %s278, 128, %s4, [#allocation4]
    $region21: #{tpu_custom_call.1} parent=1 // pred_fallthru
      _
    // Predicated region
    $region22: #{tpu_custom_call.1} parent=1 // pred_check
      _
    $region23: #{tpu_custom_call.1} parent=1 // pred_check_branch
      %282 = sbr.rel (0) target = $region25
    $region24: #{tpu_custom_call.1} parent=1 // pred_region
      %283 = dma.done [#allocation4], 128
    $region25: #{tpu_custom_call.1} parent=1 // pred_fallthru
      _
    %284 = vsyncpa [#allocation4], 1

</llo_original>
